<compile_context>
chip_gen: v5e
topology: v5e:2x2
jax: 0.10.0
libtpu: 0.0.40
codegen_flags: <defaults>
</compile_context>

<pallas_src>
import functools

import jax
import jax.numpy as jnp
from jax import lax
from jax.experimental import pallas as pl
from jax.experimental.pallas import tpu as pltpu


# --------------------------------------------------------------------------- #
# small helpers
# --------------------------------------------------------------------------- #

def _relu6(v):
    return jnp.clip(v, 0.0, 6.0)


@functools.lru_cache(maxsize=None)
def _roll_is_jnp_convention() -> bool:
    """One-shot defensive probe: pltpu.roll(x, s) == jnp.roll(x, s)?

    Expected True (elements move toward higher indices for positive shift).
    Probed once *outside* any trace so a convention difference in the lowering
    can never silently corrupt the 3x3 stencil below.
    """
    def k(x_ref, o_ref):
        o_ref[...] = pltpu.roll(x_ref[...], shift=1, axis=1)

    x = jnp.arange(8 * 128, dtype=jnp.float32).reshape(8, 128)
    y = pl.pallas_call(
        k, out_shape=jax.ShapeDtypeStruct((8, 128), jnp.float32))(x)
    return bool(y[0, 1] == x[0, 0])


def _shift_val(x, d, axis, roll_like_jnp):
    """Cyclic shifted read: y[..., i, ...] = x[..., (i + d) % n, ...].

    Uses an XLU rotate (pltpu.roll) when the dim has native size (multiple of
    128 lanes / 8 sublanes); otherwise falls back to a concat of two static
    slices (always lowers, only used for the tiny sublane-row swap).
    """
    n = x.shape[axis]
    s = (-d) % n                      # jnp.roll shift realising "read at i+d"
    if s == 0:
        return x
    native = 128 if axis == x.ndim - 1 else 8
    if n % native == 0:
        shift = s if roll_like_jnp else (n - s) % n
        return pltpu.roll(x, shift=shift, axis=axis)
    hi = [slice(None)] * x.ndim
    lo = [slice(None)] * x.ndim
    hi[axis] = slice(n - s, n)
    lo[axis] = slice(0, n - s)
    return jnp.concatenate([x[tuple(hi)], x[tuple(lo)]], axis=axis)


def _stencil_masks(H, W, R, L):
    """Iota masks for the reflect-padded 3x3 stencil on an (R, L) slab holding
    an (H, W) image flattened row-major, k = L // W image rows per sublane row
    (k == 1 recovers the natural (H, W) layout)."""
    k = L // W
    l_idx = lax.broadcasted_iota(jnp.int32, (R, L), 1)
    r_idx = lax.broadcasted_iota(jnp.int32, (R, L), 0)
    w_idx = l_idx % W
    h_idx = r_idx * k + l_idx // W
    return dict(
        w_first=w_idx == 0,
        w_last=w_idx == W - 1,
        h_first=h_idx == 0,
        h_last=h_idx == H - 1,
        head=l_idx < W,           # first image row inside each sublane row
        tail=l_idx >= L - W,      # last image row inside each sublane row
    )


def _row_taps(x, masks, W, roll_like_jnp):
    """Values of x at image rows h-1 / h / h+1 (reflection at the borders).

    A row step is a flat shift of +-W lanes; the sublane-row boundary is
    crossed via a cyclic row swap selected only on the head/tail lanes."""
    x_dn = _shift_val(x, +1, 0, roll_like_jnp)
    x_up = _shift_val(x, -1, 0, roll_like_jnp)
    raw_p = jnp.where(masks["tail"],
                      _shift_val(x_dn, +W, 1, roll_like_jnp),
                      _shift_val(x, +W, 1, roll_like_jnp))
    raw_m = jnp.where(masks["head"],
                      _shift_val(x_up, -W, 1, roll_like_jnp),
                      _shift_val(x, -W, 1, roll_like_jnp))
    r_p = jnp.where(masks["h_last"], raw_m, raw_p)    # reflect h+1 at h==H-1
    r_m = jnp.where(masks["h_first"], raw_p, raw_m)   # reflect h-1 at h==0
    return r_m, x, r_p


def _col_taps(y, masks, roll_like_jnp):
    """Values of y at image cols w-1 / w / w+1 (reflection at the borders)."""
    y_p = _shift_val(y, +1, 1, roll_like_jnp)
    y_m = _shift_val(y, -1, 1, roll_like_jnp)
    c_p = jnp.where(masks["w_last"], y_m, y_p)
    c_m = jnp.where(masks["w_first"], y_p, y_m)
    return c_m, y, c_p


# --------------------------------------------------------------------------- #
# in-kernel compute blocks (weights are scalars read from the SMEM vector)
# --------------------------------------------------------------------------- #

def _conv1x1(p_ref, base, xs, cout, cin, bias_base=None):
    """Pointwise conv on a per-channel list of (R, L) slabs; VPU MACs with
    SMEM-scalar weights (scalar -> vreg splat)."""
    outs = []
    for o in range(cout):
        acc = p_ref[base + o * cin] * xs[0]
        for i in range(1, cin):
            acc = acc + p_ref[base + o * cin + i] * xs[i]
        if bias_base is not None:
            acc = acc + p_ref[bias_base + o]
        outs.append(acc)
    return outs


def _dwconv3x3_reflect(p_ref, base, xs, masks, W, roll_like_jnp):
    """Depthwise 3x3 conv with reflection padding, built from shifted reads."""
    outs = []
    for c, x in enumerate(xs):
        rows = _row_taps(x, masks, W, roll_like_jnp)
        acc = None
        for dy in range(3):
            cols = _col_taps(rows[dy], masks, roll_like_jnp)
            for dx in range(3):
                t = p_ref[base + c * 9 + dy * 3 + dx] * cols[dx]
                acc = t if acc is None else acc + t
        outs.append(acc)
    return outs


def _inverted_residual(p_ref, ofs, xs, half, hidden, masks, W, roll_like_jnp):
    """1x1 conv -> ReLU6 -> reflect-pad dw3x3 -> ReLU6 -> 1x1 conv (no bias)."""
    h = [_relu6(v) for v in _conv1x1(p_ref, ofs["w1"], xs, hidden, half)]
    h = [_relu6(v) for v in
         _dwconv3x3_reflect(p_ref, ofs["wd"], h, masks, W, roll_like_jnp)]
    return _conv1x1(p_ref, ofs["w2"], h, half, hidden)


def _param_offsets(num_layers, C, hidden):
    """Static SMEM offsets for every weight scalar (must match the wrapper's
    packing order)."""
    half = C // 2
    offs, pos = [], 0
    for _ in range(num_layers):
        d = {"w_sc": pos, "b_sc": pos + C * C}
        pos += C * C + C
        for name in ("phi", "rho", "eta"):
            d[name] = {"w1": pos,
                       "wd": pos + hidden * half,
                       "w2": pos + hidden * half + hidden * 9}
            pos += hidden * half + hidden * 9 + half * hidden
        offs.append(d)
    return offs, pos


def _detail_kernel(x_ref, p_ref, o_ref, *, num_layers, C, hidden, H, W,
                   roll_like_jnp):
    half = C // 2
    R, L = x_ref.shape[2], x_ref.shape[3]
    masks = _stencil_masks(H, W, R, L)          # hoisted: shared by all layers
    offs, _ = _param_offsets(num_layers, C, hidden)

    z1 = [x_ref[0, c] for c in range(half)]
    z2 = [x_ref[0, half + c] for c in range(half)]

    # TODO(synk): if num_layers grows beyond ~2, move the layer loop onto an
    # "arbitrary" grid axis with z1/z2 carried in VMEM scratch to bound live
    # ranges instead of this static unroll.
    for layer in range(num_layers):
        ofs = offs[layer]
        # shffleconv: 1x1 conv + bias over cat(z1, z2), then channel split
        y = _conv1x1(p_ref, ofs["w_sc"], z1 + z2, C, C, bias_base=ofs["b_sc"])
        z1, z2 = y[:half], y[half:]
        # INN coupling
        phi = _inverted_residual(p_ref, ofs["phi"], z1, half, hidden, masks, W,
                                 roll_like_jnp)
        z2 = [a + b for a, b in zip(z2, phi)]
        rho = _inverted_residual(p_ref, ofs["rho"], z2, half, hidden, masks, W,
                                 roll_like_jnp)
        eta = _inverted_residual(p_ref, ofs["eta"], z2, half, hidden, masks, W,
                                 roll_like_jnp)
        z1 = [a * jnp.exp(r) + e for a, r, e in zip(z1, rho, eta)]

    for c in range(half):
        o_ref[0, c] = (z1[c] + z2[c]).astype(o_ref.dtype)


# --------------------------------------------------------------------------- #
# wrapper
# --------------------------------------------------------------------------- #

def detail_feature_extraction_forward(x, layers_params):
    """Forward of DetailFeatureExtraction1.  x: (B, C, H, W) float32 (NCHW)."""
    B, C, H, W = x.shape
    half = C // 2
    num_layers = len(layers_params)
    hidden = layers_params[0]["phi"]["w1"].shape[0]
    assert H >= 2 and W >= 2, "ReflectionPad2d(1) needs H, W >= 2"

    # Lane-dense in-kernel slab layout (R, L): flatten each (H, W) channel to
    # (H*W//128, 128) when W < 128 so all VPU ops / stores use full-lane vregs.
    if W < 128 and 128 % W == 0 and (H * W) % 128 == 0:
        R, L = (H * W) // 128, 128
    else:                       # W >= 128 already lane-dense, or odd shapes
        R, L = H, W
    x_k = x.reshape(B, C, R, L)

    # Pack every weight/bias of every layer into ONE flat f32 vector (single
    # DMA; read as SMEM scalars inside the kernel).
    pieces = []
    for lp in layers_params:
        pieces.append(lp["w_sc"][:, :, 0, 0].reshape(-1))
        pieces.append(lp["b_sc"].reshape(-1))
        for name in ("phi", "rho", "eta"):
            blk = lp[name]
            pieces.append(blk["w1"][:, :, 0, 0].reshape(-1))
            pieces.append(blk["wd"].reshape(-1))
            pieces.append(blk["w2"][:, :, 0, 0].reshape(-1))
    params = jnp.concatenate(pieces).astype(jnp.float32)
    _, n_params = _param_offsets(num_layers, C, hidden)
    assert params.shape[0] == n_params

    roll_like_jnp = _roll_is_jnp_convention()   # probed outside any trace

    kernel = functools.partial(
        _detail_kernel, num_layers=num_layers, C=C, hidden=hidden,
        H=H, W=W, roll_like_jnp=roll_like_jnp)

    out = pl.pallas_call(
        kernel,
        out_shape=jax.ShapeDtypeStruct((B, half, R, L), jnp.float32),
        grid=(B,),
        in_specs=[
            pl.BlockSpec((1, C, R, L), lambda b: (b, 0, 0, 0)),
            pl.BlockSpec(memory_space=pltpu.MemorySpace.SMEM),  # packed params
        ],
        out_specs=pl.BlockSpec((1, half, R, L), lambda b: (b, 0, 0, 0)),
        compiler_params=pltpu.CompilerParams(
            dimension_semantics=("parallel",),      # v7x: one image per TC
            vmem_limit_bytes=32 * 1024 * 1024,      # explicit, fits all chips
        ),
    )(x_k, params)
    # TODO(synk): for B == 1 with large H (v7x dual-TC / 64 MiB VMEM), add an
    # H-tiled "parallel" grid axis with a 1-row halo for the depthwise 3x3.
    return out.reshape(B, half, H, W)


# --------------------------------------------------------------------------- #
# pure-JAX reference
# --------------------------------------------------------------------------- #

def _reference_forward(x, layers_params):
    B, C, H, W = x.shape
    half = C // 2

    def relu6(v):
        return jnp.clip(v, 0.0, 6.0)

    def conv1x1(z, w):  # z: (B, Cin, H, W), w: (Cout, Cin, 1, 1)
        w2 = w[:, :, 0, 0]
        return jnp.sum(w2[None, :, :, None, None] * z[:, None], axis=2)

    def dwconv(z, wd):  # z: (B, ch, H, W), wd: (ch, 1, 3, 3)
        zp = jnp.pad(z, ((0, 0), (0, 0), (1, 1), (1, 1)), mode="reflect")
        out = jnp.zeros_like(z)
        for dy in range(3):
            for dx in range(3):
                out = out + wd[None, :, 0, dy, dx][:, :, None, None] * \
                    zp[:, :, dy:dy + H, dx:dx + W]
        return out

    def irb(z, p):
        h = relu6(conv1x1(z, p["w1"]))
        h = relu6(dwconv(h, p["wd"]))
        return conv1x1(h, p["w2"])

    z1, z2 = x[:, :half], x[:, half:]
    for lp in layers_params:
        y = conv1x1(jnp.concatenate([z1, z2], axis=1), lp["w_sc"]) \
            + lp["b_sc"][None, :, None, None]
        z1, z2 = y[:, :half], y[:, half:]
        z2 = z2 + irb(z1, lp["phi"])
        z1 = z1 * jnp.exp(irb(z2, lp["rho"])) + irb(z2, lp["eta"])
    return z1 + z2


# --------------------------------------------------------------------------- #
# params
# --------------------------------------------------------------------------- #

def _init_irb(key, inp, oup, expand_ratio):
    hidden = int(inp * expand_ratio)
    k1, k2, k3 = jax.random.split(key, 3)
    return dict(
        w1=0.2 * jax.random.normal(k1, (hidden, inp, 1, 1), jnp.float32),
        wd=0.2 * jax.random.normal(k2, (hidden, 1, 3, 3), jnp.float32),
        w2=0.2 * jax.random.normal(k3, (oup, hidden, 1, 1), jnp.float32),
    )


def init_params(key, in_put, num_layers=1):
    half = in_put // 2
    layers = []
    for _ in range(num_layers):
        key, ksc, kb, kphi, krho, keta = jax.random.split(key, 6)
        layers.append(dict(
            w_sc=0.2 * jax.random.normal(ksc, (in_put, in_put, 1, 1),
                                         jnp.float32),
            b_sc=0.1 * jax.random.normal(kb, (in_put,), jnp.float32),
            phi=_init_irb(kphi, half, half, 2),
            rho=_init_irb(krho, half, half, 2),
            eta=_init_irb(keta, half, half, 2),
        ))
    return layers


# --------------------------------------------------------------------------- #
# main
# --------------------------------------------------------------------------- #

if __name__ == "__main__":
    B, C, H, W = 2, 4, 16, 16          # DetailFeatureExtraction1(in_put=4)
    num_layers = 1

    key = jax.random.PRNGKey(0)
    kx, kp = jax.random.split(key)
    x = jax.random.normal(kx, (B, C, H, W), jnp.float32)   # NCHW like PyTorch
    params = init_params(kp, C, num_layers)

    out = jax.block_until_ready(detail_feature_extraction_forward(x, params))

    assert out.shape == (B, C // 2, H, W)
    assert bool(jnp.all(jnp.isfinite(out)))

    ref = jax.block_until_ready(_reference_forward(x, params))
    max_err = float(jnp.max(jnp.abs(out - ref)))
    assert jnp.allclose(out, ref, rtol=2e-4, atol=2e-4), max_err

    print("KERNEL_OK")
</pallas_src>

<mosaic_0001>
module attributes {stable_mosaic.version = 11 : i64} {
  func.func @k(%arg0: memref<8x128xf32, #tpu.memory_space<vmem>>, %arg1: memref<8x128xf32, #tpu.memory_space<vmem>>) attributes {dimension_semantics = [], scalar_prefetch = 0 : i64, scratch_operands = 0 : i64, tpu.core_type = #tpu.core_type<tc>} {
    %c0 = arith.constant 0 : index
    %c0_0 = arith.constant 0 : index
    %0 = vector.load %arg0[%c0, %c0_0] : memref<8x128xf32, #tpu.memory_space<vmem>>, vector<8x128xf32>
    %c1_i32 = arith.constant 1 : i32
    %1 = tpu.dynamic_rotate %0 by %c1_i32 dim 1 : vector<8x128xf32>, i32 -> vector<8x128xf32>
    %c0_1 = arith.constant 0 : index
    %c0_2 = arith.constant 0 : index
    %2 = vector.load %arg1[%c0_1, %c0_2] : memref<8x128xf32, #tpu.memory_space<vmem>>, vector<8x128xf32>
    tpu.vector_store %arg1[%c0_1, %c0_2], %1 {strides = array<i32>} : memref<8x128xf32, #tpu.memory_space<vmem>>, vector<8x128xf32>,
    return
  }
}

</mosaic_0001>

<llo_original>
// kernel: tpu_custom_call.1
$region0: #{tpu_custom_call.1}
  #allocation0 [shape = 'u32[]', space=smem, size = 0x4, offset = 0x4, fixed_abs, tag = 'smem constant byte address 0x4 - core index']
  #allocation1 [shape = 'u32[72,128]{1,0:T(1,128)}', space=vmem, size = 0x9000, scoped, tag = 'internal scratch']
  %s0 = inlined_call_operand.hbm [shape: f32[8,128], index: 0, kind: input, shape index: {}]
  %s1 = inlined_call_operand.hbm [shape: f32[8,128], index: 1, kind: output, shape index: {}]
  %s2 = sld [smem:[#allocation0]]
  $region18: #{tpu_custom_call.1} parent=0
    _
  %s4 = ssub.s32 1, %s2
  %s5 = scalar_select 0, %s4, %s2
  $region1: #{tpu_custom_call.1} parent=0
    #allocation2 [shape = 'u8[4096]{0}', space=vmem, size = 0x1000, scoped, tag = 'input window, operand 0, single buffered']
    #allocation3 [shape = 's32[1]{0}', space=sflag, size = 0x4, scoped, tag = 'scoped memory for tpu_custom_call.1']
    #allocation4 [shape = 's32[1]{0}', space=sflag, size = 0x4, scoped, tag = 'scoped memory for tpu_custom_call.1']
    #allocation5 [shape = 'u8[4096]{0}', space=vmem, size = 0x1000, scoped, tag = 'output window, operand 0, single buffered']
    %6 = vsyncpa [#allocation3], 0
    %7 = vsyncpa [#allocation4], 0
    // Predicated region
    $region2: #{tpu_custom_call.1} parent=1 // pred_check
      _
    $region3: #{tpu_custom_call.1} parent=1 // pred_check_branch
      %9 = sbr.rel (0) target = $region5
    $region4: #{tpu_custom_call.1} parent=1 // pred_region
      %11 = vsyncadd [#allocation3], 0
      %s13 = sshll.u32 %s0, 4
      %s14 = int_to_ptr.hbm [resolvable:$true] %s13
      %s15 = sshll.u32 [#allocation2], 4
      %s16 = int_to_ptr.vmem [resolvable:$true] %s15
      %18 = dma.hbm_to_vmem [thread:$0]  %s14, 128, %s16, [#allocation3]
    $region5: #{tpu_custom_call.1} parent=1 // pred_fallthru
      _
    // Predicated region
    $region6: #{tpu_custom_call.1} parent=1 // pred_check
      _
    $region7: #{tpu_custom_call.1} parent=1 // pred_check_branch
      %20 = sbr.rel (0) target = $region9
    $region8: #{tpu_custom_call.1} parent=1 // pred_region
      %22 = dma.done [#allocation3], 128
    $region9: #{tpu_custom_call.1} parent=1 // pred_fallthru
      _
    %v23 = vld [vmem:[#allocation2] sm:$0xff]
    %24 = vrot.lane.b32.xlu0 %v23, 1
    %v25 = vpop.permute.xlu0 %24
    %26 = vst [vmem:[#allocation5] sm:$0xff] %v25
    // Predicated region
    $region10: #{tpu_custom_call.1} parent=1 // pred_check
      _
    $region11: #{tpu_custom_call.1} parent=1 // pred_check_branch
      %28 = sbr.rel (0) target = $region13
    $region12: #{tpu_custom_call.1} parent=1 // pred_region
      %30 = vsyncadd [#allocation4], 0
      %s32 = sshll.u32 [#allocation5], 4
      %s33 = int_to_ptr.vmem [resolvable:$true] %s32
      %s34 = sshll.u32 %s1, 4
      %s35 = int_to_ptr.hbm [resolvable:$true] %s34
      %37 = dma.vmem_to_hbm [thread:$0]  %s33, 128, %s35, [#allocation4]
    $region13: #{tpu_custom_call.1} parent=1 // pred_fallthru
      _
    // Predicated region
    $region14: #{tpu_custom_call.1} parent=1 // pred_check
      _
    $region15: #{tpu_custom_call.1} parent=1 // pred_check_branch
      %39 = sbr.rel (0) target = $region17
    $region16: #{tpu_custom_call.1} parent=1 // pred_region
      %41 = dma.done [#allocation4], 128
    $region17: #{tpu_custom_call.1} parent=1 // pred_fallthru
      _
    %42 = vsyncpa [#allocation3], 1
    %43 = vsyncpa [#allocation4], 1

</llo_original>
